<compile_context>
chip_gen: v5e
topology: v5e:2x2
jax: 0.10.0
libtpu: 0.0.40
codegen_flags: <defaults>
</compile_context>

<pallas_src>
import functools

import jax
import jax.numpy as jnp
from jax import lax
from jax.experimental import pallas as pl
from jax.experimental.pallas import tpu as pltpu

_PAD_COORD = 1.0e6  # padded points are pushed far away from every real point


def _chamfer_kernel(x_ref, y_ref, o_ref, rowmin_ref, colmin_ref, *,
                    n_real, m_real, mask_rows, mask_cols):
    # x_ref:      (1, Tn, Dp)        preds tile (points on sublanes)
    # y_ref:      (1, Dp, Tm)        gts tile, D-major (points on lanes)
    # o_ref:      (1, 1, 128)        per-batch per-lane partial sums
    # rowmin_ref: (Tn, 128)          running lane-group row mins (over M)
    # colmin_ref: (m_tiles, 8, Tm)   running sublane-group col mins (over N)
    ni = pl.program_id(1)
    mj = pl.program_id(2)
    n_last = pl.num_programs(1) - 1
    m_last = pl.num_programs(2) - 1

    @pl.when((ni == 0) & (mj == 0))
    def _():
        o_ref[...] = jnp.zeros_like(o_ref)

    x = x_ref[0]                       # (Tn, Dp), native dtype (f32/bf16/...)
    y = y_ref[0]                       # (Dp, Tm), native dtype
    tn = x.shape[0]
    tm = y.shape[1]

    # MXU path for every D: keep native dtype into the MXU, accumulate in f32.
    zz = lax.dot_general(x, y, (((1,), (0,)), ((), ())),
                         preferred_element_type=jnp.float32)   # (Tn, Tm)
    xf = x.astype(jnp.float32)
    yf = y.astype(jnp.float32)
    rx = jnp.sum(xf * xf, axis=1, keepdims=True)               # (Tn, 1)
    ry = jnp.sum(yf * yf, axis=0, keepdims=True)               # (1, Tm)
    p = rx + ry - 2.0 * zz                                     # (Tn, Tm)

    # Deferred reductions: pure-VALU folds into lane-group / sublane-group
    # partial mins (each p element touched exactly once, no XLU here).
    rmin = p[:, 0:128]                                         # (Tn, 128)
    for g in range(1, tm // 128):
        rmin = jnp.minimum(rmin, p[:, g * 128:(g + 1) * 128])
    cmin = p[0:8, :]                                           # (8, Tm)
    for g in range(1, tn // 8):
        cmin = jnp.minimum(cmin, p[g * 8:(g + 1) * 8, :])

    # Running row-min partials over the M axis (mj innermost).  First tile
    # writes directly -> no +inf init pass.
    @pl.when(mj == 0)
    def _():
        rowmin_ref[...] = rmin

    @pl.when(mj > 0)
    def _():
        rowmin_ref[...] = jnp.minimum(rowmin_ref[...], rmin)

    # Running column-min partials over the N axis, kept per M tile.
    @pl.when(ni == 0)
    def _():
        colmin_ref[mj] = cmin

    @pl.when(ni > 0)
    def _():
        colmin_ref[mj] = jnp.minimum(colmin_ref[mj], cmin)

    # Finalize row mins once the M sweep for this N tile is complete.
    @pl.when(mj == m_last)
    def _():
        row_min = jnp.min(rowmin_ref[...], axis=1, keepdims=True)   # (Tn, 1)
        if mask_rows:
            row_valid = (ni * tn + lax.broadcasted_iota(
                jnp.int32, (tn, 1), 0)) < n_real
            row_min = jnp.where(row_valid, row_min, 0.0)
        lane0 = lax.broadcasted_iota(jnp.int32, (1, 1, 128), 2) == 0
        o_ref[...] = o_ref[...] + jnp.where(lane0, jnp.sum(row_min), 0.0)

    # Finalize column mins once the N sweep for this M tile is complete.
    @pl.when(ni == n_last)
    def _():
        col_min = jnp.min(colmin_ref[mj], axis=0, keepdims=True)    # (1, Tm)
        if mask_cols:
            col_valid = (mj * tm + lax.broadcasted_iota(
                jnp.int32, (1, tm), 1)) < m_real
            col_min = jnp.where(col_valid, col_min, 0.0)
        acc = col_min[:, 0:128]                                     # (1, 128)
        for g in range(1, tm // 128):
            acc = acc + col_min[:, g * 128:(g + 1) * 128]
        o_ref[...] = o_ref[...] + acc.reshape(1, 1, 128)


def _round_up(x, a):
    return ((x + a - 1) // a) * a


def _sublane_align(dtype):
    # bf16 packs two rows per sublane, int8/fp8 four -> align the preds tile
    # (sublane axis) to the packed tile quantum.
    return {4: 8, 2: 16, 1: 32}.get(jnp.dtype(dtype).itemsize, 8)


@functools.partial(jax.jit, static_argnames=("max_tile_n", "max_tile_m"))
def chamfer_loss(preds, gts, *, max_tile_n=512, max_tile_m=1024):
    """Pallas implementation of ChamferLoss.forward(preds, gts).

    preds: (B, N, D), gts: (B, M, D) -> scalar float32.
    """
    bs, n, d = preds.shape
    _, m, _ = gts.shape

    # Chamfer loss is symmetric in its two point sets; put the smaller set on
    # the lane / inner-grid (M) axis so the per-M-tile colmin scratch
    # (8 * 4 bytes * M_pad) stays small even for very large point clouds.
    if m > n:
        preds, gts = gts, preds
        n, m = m, n

    sub_align = _sublane_align(preds.dtype)
    tn = _round_up(min(max_tile_n, n), sub_align)
    tm = _round_up(min(max_tile_m, m), 128)
    n_pad = _round_up(n, tn)
    m_pad = _round_up(m, tm)
    d_pad = _round_up(d, 8)
    n_tiles = n_pad // tn
    m_tiles = m_pad // tm

    # Pad ragged N / M with a far-away coordinate: padded points never win a
    # min against real points, and they are excluded from the sums at
    # finalize.  D is zero-padded (does not change any pairwise distance).
    preds_p = jnp.pad(preds, ((0, 0), (0, n_pad - n), (0, 0)),
                      constant_values=_PAD_COORD)
    gts_p = jnp.pad(gts, ((0, 0), (0, m_pad - m), (0, 0)),
                    constant_values=_PAD_COORD)
    if d_pad != d:
        preds_p = jnp.pad(preds_p, ((0, 0), (0, 0), (0, d_pad - d)))
        gts_p = jnp.pad(gts_p, ((0, 0), (0, 0), (0, d_pad - d)))

    # D-major layout for gts so the large M axis is lane-dense in the kernel
    # (one cheap XLA transpose in the wrapper, no in-kernel transpose).
    gts_t = jnp.transpose(gts_p, (0, 2, 1))   # (B, Dp, M_pad)

    kernel = functools.partial(
        _chamfer_kernel,
        n_real=n, m_real=m,
        mask_rows=(n_pad != n), mask_cols=(m_pad != m))

    partials = pl.pallas_call(
        kernel,
        out_shape=jax.ShapeDtypeStruct((bs, 1, 128), jnp.float32),
        grid_spec=pltpu.PrefetchScalarGridSpec(
            num_scalar_prefetch=0,
            grid=(bs, n_tiles, m_tiles),
            in_specs=[
                pl.BlockSpec((1, tn, d_pad), lambda b, i, j: (b, i, 0)),
                pl.BlockSpec((1, d_pad, tm), lambda b, i, j: (b, 0, j)),
            ],
            out_specs=pl.BlockSpec((1, 1, 128), lambda b, i, j: (b, 0, 0)),
            scratch_shapes=[
                pltpu.VMEM((tn, 128), jnp.float32),          # row-min partials
                pltpu.VMEM((m_tiles, 8, tm), jnp.float32),   # col-min partials
            ],
        ),
        compiler_params=pltpu.CompilerParams(
            # Per-batch output blocks -> batch axis is independent and can be
            # sharded across v7x's two TensorCores; N/M axes carry accumulators.
            # TODO(synk): for B < 2 on v7x, add a leading parallel split of N
            # (per-split partial outputs combined in the wrapper).
            dimension_semantics=("parallel", "arbitrary", "arbitrary"),
            # Fits v7x's 64 MiB physical VMEM; v5e/v6e (128 MiB) could raise
            # this together with the tile caps for less per-step overhead.
            vmem_limit_bytes=48 * 1024 * 1024,
        ),
    )(preds_p, gts_t)

    # Column contributions live per-lane, row contributions in lane 0 of each
    # per-batch partial; one sum over lanes and batches gives the loss.
    return jnp.sum(partials)


def _chamfer_loss_ref(preds, gts):
    # Pure-JAX reference mirroring the PyTorch module exactly.
    zz = jnp.einsum("bnd,bmd->bnm", preds, gts,
                    precision=lax.Precision.HIGHEST)
    rx = jnp.sum(preds * preds, axis=-1)[:, :, None]  # (B, N, 1)
    ry = jnp.sum(gts * gts, axis=-1)[:, None, :]      # (B, 1, M)
    P = rx + ry - 2.0 * zz
    return jnp.sum(jnp.min(P, axis=1)) + jnp.sum(jnp.min(P, axis=2))


if __name__ == "__main__":
    key = jax.random.PRNGKey(0)
    k1, k2, k3, k4, k5, k6 = jax.random.split(key, 6)

    # 1) Small point clouds in the module's (B, num_points, point_dim) layout;
    #    exercises the padded/masked M path (16 -> 128 lanes).
    B, N, M, D = 2, 16, 16, 3
    preds = jax.random.normal(k1, (B, N, D), dtype=jnp.float32)
    gts = jax.random.normal(k2, (B, M, D), dtype=jnp.float32)
    loss = jax.block_until_ready(chamfer_loss(preds, gts))
    ref = jax.block_until_ready(_chamfer_loss_ref(preds, gts))
    assert jnp.allclose(loss, ref, rtol=1e-4, atol=1e-3), (loss, ref)

    # 2) Ragged multi-tile case: exercises row + column padding/masking, the
    #    multi-tile N/M accumulation path, and the symmetric preds/gts swap.
    B2, N2, M2, D2 = 2, 200, 300, 3
    preds2 = jax.random.normal(k3, (B2, N2, D2), dtype=jnp.float32)
    gts2 = jax.random.normal(k4, (B2, M2, D2), dtype=jnp.float32)
    loss2 = jax.block_until_ready(
        chamfer_loss(preds2, gts2, max_tile_n=64, max_tile_m=128))
    ref2 = jax.block_until_ready(_chamfer_loss_ref(preds2, gts2))
    assert jnp.allclose(loss2, ref2, rtol=1e-4, atol=1e-3), (loss2, ref2)

    # 3) Exact-fit multi-tile case (no padding, mask-free fast path).
    B3, N3, M3, D3 = 2, 128, 256, 3
    preds3 = jax.random.normal(k5, (B3, N3, D3), dtype=jnp.float32)
    gts3 = jax.random.normal(k6, (B3, M3, D3), dtype=jnp.float32)
    loss3 = jax.block_until_ready(
        chamfer_loss(preds3, gts3, max_tile_n=64, max_tile_m=128))
    ref3 = jax.block_until_ready(_chamfer_loss_ref(preds3, gts3))
    assert jnp.allclose(loss3, ref3, rtol=1e-4, atol=1e-3), (loss3, ref3)

    print("KERNEL_OK")
</pallas_src>

<mosaic_0001>
module attributes {stable_mosaic.version = 11 : i64} {
  func.func @_chamfer_kernel(%arg0: i32, %arg1: i32, %arg2: i32, %arg3: memref<1x16x8xf32, #tpu.memory_space<vmem>>, %arg4: memref<1x8x128xf32, #tpu.memory_space<vmem>>, %arg5: memref<1x1x128xf32, #tpu.memory_space<vmem>>, %arg6: memref<16x128xf32, #tpu.memory_space<vmem>>, %arg7: memref<1x8x128xf32, #tpu.memory_space<vmem>>) attributes {dimension_semantics = [#tpu.dimension_semantics<parallel>, #tpu.dimension_semantics<arbitrary>, #tpu.dimension_semantics<arbitrary>], iteration_bounds = array<i64: 2, 1, 1>, scalar_prefetch = 0 : i64, scratch_operands = 2 : i64, tpu.core_type = #tpu.core_type<tc>, window_params = [{transform_indices = @transform_0, window_bounds = array<i64: 1, 16, 8>}, {transform_indices = @transform_1, window_bounds = array<i64: 1, 8, 128>}, {transform_indices = @transform_2, window_bounds = array<i64: 1, 1, 128>}]} {
    %c0_i32 = arith.constant 0 : i32
    %0 = arith.cmpi eq, %arg1, %c0_i32 : i32
    %c0_i32_0 = arith.constant 0 : i32
    %1 = arith.cmpi eq, %arg2, %c0_i32_0 : i32
    %2 = arith.andi %0, %1 : i1
    %3 = arith.extui %2 : i1 to i32
    %c0_i32_1 = arith.constant 0 : i32
    %4 = arith.cmpi ne, %3, %c0_i32_1 : i32
    scf.if %4 {
      %cst_22 = arith.constant 0.000000e+00 : f32
      %43 = vector.broadcast %cst_22 : f32 to vector<1x1x128xf32>
      %c0_23 = arith.constant 0 : index
      %c0_24 = arith.constant 0 : index
      %c0_25 = arith.constant 0 : index
      %44 = vector.load %arg5[%c0_23, %c0_24, %c0_25] : memref<1x1x128xf32, #tpu.memory_space<vmem>>, vector<1x1x128xf32>
      tpu.vector_store %arg5[%c0_23, %c0_24, %c0_25], %43 {strides = array<i32>} : memref<1x1x128xf32, #tpu.memory_space<vmem>>, vector<1x1x128xf32>,
    } else {
    }
    %c0 = arith.constant 0 : index
    %c0_2 = arith.constant 0 : index
    %c0_3 = arith.constant 0 : index
    %5 = vector.load %arg3[%c0, %c0_2, %c0_3] : memref<1x16x8xf32, #tpu.memory_space<vmem>>, vector<1x16x8xf32>
    %6 = vector.shape_cast %5 : vector<1x16x8xf32> to vector<16x8xf32>
    %c0_4 = arith.constant 0 : index
    %c0_5 = arith.constant 0 : index
    %c0_6 = arith.constant 0 : index
    %7 = vector.load %arg4[%c0_4, %c0_5, %c0_6] : memref<1x8x128xf32, #tpu.memory_space<vmem>>, vector<1x8x128xf32>
    %8 = vector.shape_cast %7 : vector<1x8x128xf32> to vector<8x128xf32>
    %cst = arith.constant dense<0.000000e+00> : vector<16x128xf32>
    %9 = tpu.matmul %6, %8, %cst {dimension_numbers = #tpu.dot_dimension_numbers<[1], [0], [0], [1], [0, 0, 1, 1], [], []>} : vector<16x8xf32>, vector<8x128xf32>, vector<16x128xf32> -> vector<16x128xf32>
    %10 = arith.mulf %6, %6 : vector<16x8xf32>
    %cst_7 = arith.constant dense<0.000000e+00> : vector<16xf32>
    %11 = vector.multi_reduction <add>, %10, %cst_7 [1] : vector<16x8xf32> to vector<16xf32>
    %12 = vector.shape_cast %11 : vector<16xf32> to vector<16x1xf32>
    %13 = arith.mulf %8, %8 : vector<8x128xf32>
    %cst_8 = arith.constant dense<0.000000e+00> : vector<128xf32>
    %14 = vector.multi_reduction <add>, %13, %cst_8 [0] : vector<8x128xf32> to vector<128xf32>
    %15 = vector.shape_cast %14 : vector<128xf32> to vector<1x128xf32>
    %16 = vector.broadcast %12 : vector<16x1xf32> to vector<16x128xf32>
    %17 = vector.broadcast %15 : vector<1x128xf32> to vector<16x128xf32>
    %18 = arith.addf %16, %17 : vector<16x128xf32>
    %cst_9 = arith.constant 2.000000e+00 : f32
    %19 = vector.broadcast %cst_9 : f32 to vector<16x128xf32>
    %20 = arith.mulf %19, %9 : vector<16x128xf32>
    %21 = arith.subf %18, %20 : vector<16x128xf32>
    %22 = vector.extract_strided_slice %21 {offsets = [0, 0], sizes = [8, 128], strides = [1, 1]} : vector<16x128xf32> to vector<8x128xf32>
    %23 = vector.extract_strided_slice %21 {offsets = [8, 0], sizes = [8, 128], strides = [1, 1]} : vector<16x128xf32> to vector<8x128xf32>
    %24 = arith.minimumf %22, %23 : vector<8x128xf32>
    %c0_i32_10 = arith.constant 0 : i32
    %25 = arith.cmpi eq, %arg2, %c0_i32_10 : i32
    %26 = arith.extui %25 : i1 to i32
    %c0_i32_11 = arith.constant 0 : i32
    %27 = arith.cmpi ne, %26, %c0_i32_11 : i32
    scf.if %27 {
      %c0_22 = arith.constant 0 : index
      %c0_23 = arith.constant 0 : index
      %43 = vector.load %arg6[%c0_22, %c0_23] : memref<16x128xf32, #tpu.memory_space<vmem>>, vector<16x128xf32>
      tpu.vector_store %arg6[%c0_22, %c0_23], %21 {strides = array<i32>} : memref<16x128xf32, #tpu.memory_space<vmem>>, vector<16x128xf32>,
    } else {
    }
    %c0_i32_12 = arith.constant 0 : i32
    %28 = arith.cmpi sgt, %arg2, %c0_i32_12 : i32
    %29 = arith.extui %28 : i1 to i32
    %c0_i32_13 = arith.constant 0 : i32
    %30 = arith.cmpi ne, %29, %c0_i32_13 : i32
    scf.if %30 {
      %c0_22 = arith.constant 0 : index
      %c0_23 = arith.constant 0 : index
      %43 = vector.load %arg6[%c0_22, %c0_23] : memref<16x128xf32, #tpu.memory_space<vmem>>, vector<16x128xf32>
      %44 = arith.minimumf %43, %21 : vector<16x128xf32>
      %c0_24 = arith.constant 0 : index
      %c0_25 = arith.constant 0 : index
      %45 = vector.load %arg6[%c0_24, %c0_25] : memref<16x128xf32, #tpu.memory_space<vmem>>, vector<16x128xf32>
      tpu.vector_store %arg6[%c0_24, %c0_25], %44 {strides = array<i32>} : memref<16x128xf32, #tpu.memory_space<vmem>>, vector<16x128xf32>,
    } else {
    }
    %c0_i32_14 = arith.constant 0 : i32
    %31 = arith.cmpi eq, %arg1, %c0_i32_14 : i32
    %32 = arith.extui %31 : i1 to i32
    %c0_i32_15 = arith.constant 0 : i32
    %33 = arith.cmpi ne, %32, %c0_i32_15 : i32
    scf.if %33 {
      %43 = arith.index_cast %arg2 : i32 to index
      %c0_22 = arith.constant 0 : index
      %c0_23 = arith.constant 0 : index
      %44 = vector.load %arg7[%43, %c0_22, %c0_23] : memref<1x8x128xf32, #tpu.memory_space<vmem>>, vector<1x8x128xf32>
      %45 = vector.shape_cast %44 : vector<1x8x128xf32> to vector<8x128xf32>
      %46 = vector.shape_cast %24 : vector<8x128xf32> to vector<1x8x128xf32>
      tpu.vector_store %arg7[%43, %c0_22, %c0_23], %46 {strides = array<i32>} : memref<1x8x128xf32, #tpu.memory_space<vmem>>, vector<1x8x128xf32>,
    } else {
    }
    %c0_i32_16 = arith.constant 0 : i32
    %34 = arith.cmpi sgt, %arg1, %c0_i32_16 : i32
    %35 = arith.extui %34 : i1 to i32
    %c0_i32_17 = arith.constant 0 : i32
    %36 = arith.cmpi ne, %35, %c0_i32_17 : i32
    scf.if %36 {
      %43 = arith.index_cast %arg2 : i32 to index
      %c0_22 = arith.constant 0 : index
      %c0_23 = arith.constant 0 : index
      %44 = vector.load %arg7[%43, %c0_22, %c0_23] : memref<1x8x128xf32, #tpu.memory_space<vmem>>, vector<1x8x128xf32>
      %45 = vector.shape_cast %44 : vector<1x8x128xf32> to vector<8x128xf32>
      %46 = arith.minimumf %45, %24 : vector<8x128xf32>
      %47 = arith.index_cast %arg2 : i32 to index
      %c0_24 = arith.constant 0 : index
      %c0_25 = arith.constant 0 : index
      %48 = vector.load %arg7[%47, %c0_24, %c0_25] : memref<1x8x128xf32, #tpu.memory_space<vmem>>, vector<1x8x128xf32>
      %49 = vector.shape_cast %48 : vector<1x8x128xf32> to vector<8x128xf32>
      %50 = vector.shape_cast %46 : vector<8x128xf32> to vector<1x8x128xf32>
      tpu.vector_store %arg7[%47, %c0_24, %c0_25], %50 {strides = array<i32>} : memref<1x8x128xf32, #tpu.memory_space<vmem>>, vector<1x8x128xf32>,
    } else {
    }
    %c0_i32_18 = arith.constant 0 : i32
    %37 = arith.cmpi eq, %arg2, %c0_i32_18 : i32
    %38 = arith.extui %37 : i1 to i32
    %c0_i32_19 = arith.constant 0 : i32
    %39 = arith.cmpi ne, %38, %c0_i32_19 : i32
    scf.if %39 {
      %c0_22 = arith.constant 0 : index
      %c0_23 = arith.constant 0 : index
      %43 = vector.load %arg6[%c0_22, %c0_23] : memref<16x128xf32, #tpu.memory_space<vmem>>, vector<16x128xf32>
      %cst_24 = arith.constant dense<0x7F800000> : vector<16xf32>
      %44 = vector.multi_reduction <minimumf>, %43, %cst_24 [1] : vector<16x128xf32> to vector<16xf32>
      %45 = vector.shape_cast %44 : vector<16xf32> to vector<16x1xf32>
      %46 = tpu.iota {dimensions = array<i32: 2>} : vector<1x1x128xi32>
      %c0_i32_25 = arith.constant 0 : i32
      %47 = vector.broadcast %c0_i32_25 : i32 to vector<1x1x128xi32>
      %48 = arith.cmpi eq, %46, %47 : vector<1x1x128xi32>
      %c0_26 = arith.constant 0 : index
      %c0_27 = arith.constant 0 : index
      %c0_28 = arith.constant 0 : index
      %49 = vector.load %arg5[%c0_26, %c0_27, %c0_28] : memref<1x1x128xf32, #tpu.memory_space<vmem>>, vector<1x1x128xf32>
      %50 = vector.shape_cast %45 : vector<16x1xf32> to vector<1x16x1xf32>
      %cst_29 = arith.constant dense<0.000000e+00> : vector<1xf32>
      %51 = vector.multi_reduction <add>, %50, %cst_29 [1, 2] : vector<1x16x1xf32> to vector<1xf32>
      %52 = vector.shape_cast %51 : vector<1xf32> to vector<1x1x1xf32>
      %53 = vector.extract %52[0, 0, 0] : f32 from vector<1x1x1xf32>
      %cst_30 = arith.constant 0.000000e+00 : f32
      %54 = vector.broadcast %53 : f32 to vector<1x1x128xf32>
      %55 = vector.broadcast %cst_30 : f32 to vector<1x1x128xf32>
      %56 = arith.select %48, %54, %55 : vector<1x1x128xi1>, vector<1x1x128xf32>
      %57 = arith.addf %49, %56 : vector<1x1x128xf32>
      %c0_31 = arith.constant 0 : index
      %c0_32 = arith.constant 0 : index
      %c0_33 = arith.constant 0 : index
      %58 = vector.load %arg5[%c0_31, %c0_32, %c0_33] : memref<1x1x128xf32, #tpu.memory_space<vmem>>, vector<1x1x128xf32>
      tpu.vector_store %arg5[%c0_31, %c0_32, %c0_33], %57 {strides = array<i32>} : memref<1x1x128xf32, #tpu.memory_space<vmem>>, vector<1x1x128xf32>,
    } else {
    }
    %c0_i32_20 = arith.constant 0 : i32
    %40 = arith.cmpi eq, %arg1, %c0_i32_20 : i32
    %41 = arith.extui %40 : i1 to i32
    %c0_i32_21 = arith.constant 0 : i32
    %42 = arith.cmpi ne, %41, %c0_i32_21 : i32
    scf.if %42 {
      %43 = arith.index_cast %arg2 : i32 to index
      %c0_22 = arith.constant 0 : index
      %c0_23 = arith.constant 0 : index
      %44 = vector.load %arg7[%43, %c0_22, %c0_23] : memref<1x8x128xf32, #tpu.memory_space<vmem>>, vector<1x8x128xf32>
      %45 = vector.shape_cast %44 : vector<1x8x128xf32> to vector<8x128xf32>
      %cst_24 = arith.constant dense<0x7F800000> : vector<128xf32>
      %46 = vector.multi_reduction <minimumf>, %45, %cst_24 [0] : vector<8x128xf32> to vector<128xf32>
      %47 = vector.shape_cast %46 : vector<128xf32> to vector<1x128xf32>
      %c128_i32 = arith.constant 128 : i32
      %48 = arith.muli %arg2, %c128_i32 : i32
      %49 = tpu.iota {dimensions = array<i32: 1>} : vector<1x128xi32>
      %50 = vector.broadcast %48 : i32 to vector<1x128xi32>
      %51 = arith.addi %50, %49 : vector<1x128xi32>
      %c16_i32 = arith.constant 16 : i32
      %52 = vector.broadcast %c16_i32 : i32 to vector<1x128xi32>
      %53 = arith.cmpi slt, %51, %52 : vector<1x128xi32>
      %cst_25 = arith.constant 0.000000e+00 : f32
      %54 = vector.broadcast %cst_25 : f32 to vector<1x128xf32>
      %55 = arith.select %53, %47, %54 : vector<1x128xi1>, vector<1x128xf32>
      %c0_26 = arith.constant 0 : index
      %c0_27 = arith.constant 0 : index
      %c0_28 = arith.constant 0 : index
      %56 = vector.load %arg5[%c0_26, %c0_27, %c0_28] : memref<1x1x128xf32, #tpu.memory_space<vmem>>, vector<1x1x128xf32>
      %57 = vector.shape_cast %55 : vector<1x128xf32> to vector<1x1x128xf32>
      %58 = arith.addf %56, %57 : vector<1x1x128xf32>
      %c0_29 = arith.constant 0 : index
      %c0_30 = arith.constant 0 : index
      %c0_31 = arith.constant 0 : index
      %59 = vector.load %arg5[%c0_29, %c0_30, %c0_31] : memref<1x1x128xf32, #tpu.memory_space<vmem>>, vector<1x1x128xf32>
      tpu.vector_store %arg5[%c0_29, %c0_30, %c0_31], %58 {strides = array<i32>} : memref<1x1x128xf32, #tpu.memory_space<vmem>>, vector<1x1x128xf32>,
    } else {
    }
    return
  }
  func.func @transform_0(%arg0: i32, %arg1: i32, %arg2: i32) -> (i32, i32, i32) {
    %c0_i32 = arith.constant 0 : i32
    %c0_i32_0 = arith.constant 0 : i32
    return %arg0, %arg1, %c0_i32 : i32, i32, i32
  }
  func.func @transform_1(%arg0: i32, %arg1: i32, %arg2: i32) -> (i32, i32, i32) {
    %c0_i32 = arith.constant 0 : i32
    %c0_i32_0 = arith.constant 0 : i32
    return %arg0, %c0_i32, %arg2 : i32, i32, i32
  }
  func.func @transform_2(%arg0: i32, %arg1: i32, %arg2: i32) -> (i32, i32, i32) {
    %c0_i32 = arith.constant 0 : i32
    %c0_i32_0 = arith.constant 0 : i32
    %c0_i32_1 = arith.constant 0 : i32
    return %arg0, %c0_i32, %c0_i32_0 : i32, i32, i32
  }
}

</mosaic_0001>

<llo_original>
// kernel: chamfer_loss.1
$region0: #{chamfer_loss.1}
  #allocation0 [shape = 'u32[]', space=smem, size = 0x4, offset = 0x4, fixed_abs, tag = 'smem constant byte address 0x4 - core index']
  #allocation1 [shape = 'u32[72,128]{1,0:T(1,128)}', space=vmem, size = 0x9000, scoped, tag = 'internal scratch']
  #allocation2 [shape = 'f32[16,128]{1,0:T(8,128)}', space=vmem, size = 0x2000, scoped, tag = 'scratch operand']
  #allocation3 [shape = 'f32[1,8,128]{2,1,0:T(8,128)}', space=vmem, size = 0x1000, scoped, tag = 'scratch operand']
  %s0 = inlined_call_operand.vmem [shape: f32[2,16,8], index: 0, kind: input, shape index: {}]
  %s1 = inlined_call_operand.vmem [shape: f32[2,8,128], index: 1, kind: input, shape index: {}]
  %s2 = inlined_call_operand.vmem [shape: f32[2,1,128], index: 2, kind: output, shape index: {}]
  %s3 = sld [smem:[#allocation0]]
  $region69: #{chamfer_loss.1} parent=0
    _
  %s5 = ssub.s32 1, %s3
  %s6 = scalar_select 0, %s5, %s3
  loop: start=0, step=1, limit=4
  $region2: #{chamfer_loss.1} parent=0 // loop_pre_header
    _
  $region3: #{chamfer_loss.1} parent=0 // loop_header
    %s8 = sphi 0, %s12
    %p9 = scmp.ge.s32.totalorder %s8, 4
    %s15 = sphi 0, %s34
    %s16 = sphi 0, %s30
    %s17 = sphi 0, %s26
    %s18 = sphi 0, %s15
    %s19 = sphi 0, %s16
    %s20 = sphi 0, %s17
    %s21 = sphi 0, %s18
    %s22 = sphi 0, %s19
    %s23 = sphi 0, %s20
    %s39 = sphi 0, %s41
    %s42 = sphi 0, %s39
    %s43 = sphi 0, %s42
    %s59 = sphi 0, %s43
    %s67 = sphi 0, %s69
    %s70 = sphi 0, %s67
    %s71 = sphi 0, %s70
    %s87 = sphi 0, %s71
    %s93 = sphi 0, %s95
    %s96 = sphi 0, %s93
    %s97 = sphi 0, %s96
    %s113 = sphi 0, %s97
  $region4: #{chamfer_loss.1} parent=0 // loop_header_branch
    %11 = sbr.rel (%p9) target = $region8
  $region5: #{chamfer_loss.1} parent=0 // loop_body
    %s13 = ssub.s32 %s8, 1
    %s14 = ssub.s32 %s8, 2
    %s24 = sadd.s32 1, %s17
    %p25 = scmp.ge.s32.totalorder %s24, 1
    %s26 = scalar_select %p25, 0, %s24
    %s27 = sadd.s32 1, %s16
    %s28 = scalar_select %p25, %s27, %s16
    %p29 = scmp.ge.s32.totalorder %s28, 1
    %s30 = scalar_select %p29, 0, %s28
    %s31 = sadd.s32 1, %s15
    %s32 = scalar_select %p29, %s31, %s15
    %p33 = scmp.ge.s32.totalorder %s32, 2
    %s34 = scalar_select %p33, 0, %s32
    %s35 = ssub.s32 %s15, %s34
    %s36 = ssub.s32 %s16, %s30
    %s37 = sor.u32 %s35, %s36
    %p38 = scmp.eq.s32.totalorder %s37, 0
    %s40 = sadd.s32 %s39, 1
    %s41 = scalar_select %p38, %s39, %s40
    %p44 = pneg %p38
    %p45 = scmp.eq.s32.totalorder %s8, 1
    %p46 = por %p44, %p45
    %p47 = scmp.ne.s32.totalorder %s39, %s42
    %p48 = scmp.eq.s32.totalorder %s8, 0
    %p49 = por %p47, %p48
    %p50 = scmp.ne.s32.totalorder %s39, %s42
    %p51 = scmp.eq.s32.totalorder %s13, 1
    %p52 = por %p50, %p51
    %p53 = scmp.ne.s32.totalorder %s42, %s43
    %p54 = scmp.eq.s32.totalorder %s13, 0
    %p55 = por %p53, %p54
    %p56 = scmp.ne.s32.totalorder %s42, %s43
    %p57 = scmp.eq.s32.totalorder %s14, 1
    %p58 = por %p56, %p57
    %p60 = scmp.ne.s32.totalorder %s43, %s59
    %p61 = scmp.eq.s32.totalorder %s14, 0
    %p62 = por %p60, %p61
    %s63 = ssub.s32 %s15, %s34
    %s64 = ssub.s32 %s17, %s26
    %s65 = sor.u32 %s63, %s64
    %p66 = scmp.eq.s32.totalorder %s65, 0
    %s68 = sadd.s32 %s67, 1
    %s69 = scalar_select %p66, %s67, %s68
    %p72 = pneg %p66
    %p73 = scmp.eq.s32.totalorder %s8, 1
    %p74 = por %p72, %p73
    %p75 = scmp.ne.s32.totalorder %s67, %s70
    %p76 = scmp.eq.s32.totalorder %s8, 0
    %p77 = por %p75, %p76
    %p78 = scmp.ne.s32.totalorder %s67, %s70
    %p79 = scmp.eq.s32.totalorder %s13, 1
    %p80 = por %p78, %p79
    %p81 = scmp.ne.s32.totalorder %s70, %s71
    %p82 = scmp.eq.s32.totalorder %s13, 0
    %p83 = por %p81, %p82
    %p84 = scmp.ne.s32.totalorder %s70, %s71
    %p85 = scmp.eq.s32.totalorder %s14, 1
    %p86 = por %p84, %p85
    %p88 = scmp.ne.s32.totalorder %s71, %s87
    %p89 = scmp.eq.s32.totalorder %s14, 0
    %p90 = por %p88, %p89
    %s91 = ssub.s32 %s15, %s34
    %p92 = scmp.eq.s32.totalorder %s91, 0
    %s94 = sadd.s32 %s93, 1
    %s95 = scalar_select %p92, %s93, %s94
    %p98 = pneg %p92
    %p99 = scmp.eq.s32.totalorder %s8, 1
    %p100 = por %p98, %p99
    %p101 = scmp.ne.s32.totalorder %s93, %s96
    %p102 = scmp.eq.s32.totalorder %s8, 0
    %p103 = por %p101, %p102
    %p104 = scmp.ne.s32.totalorder %s93, %s96
    %p105 = scmp.eq.s32.totalorder %s13, 1
    %p106 = por %p104, %p105
    %p107 = scmp.ne.s32.totalorder %s96, %s97
    %p108 = scmp.eq.s32.totalorder %s13, 0
    %p109 = por %p107, %p108
    %p110 = scmp.ne.s32.totalorder %s96, %s97
    %p111 = scmp.eq.s32.totalorder %s14, 1
    %p112 = por %p110, %p111
    %p114 = scmp.ne.s32.totalorder %s97, %s113
    %p115 = scmp.eq.s32.totalorder %s14, 0
    %p116 = por %p114, %p115
    %p117 = scmp.le.s32.totalorder 1, %s8
    %p118 = scmp.lt.s32.totalorder %s8, 3
    %p119 = pnand %p117, %p118
    %p120 = pneg %p119
    // Predicated region
    $region9: #{chamfer_loss.1} parent=5 // pred_check
      _
    $region10: #{chamfer_loss.1} parent=5 // pred_check_branch
      %122 = sbr.rel (%p119) target = $region12
    $region11: #{chamfer_loss.1} parent=5 // pred_region
      %s123 = ssub.s32 %s8, 1
    $region12: #{chamfer_loss.1} parent=5 // pred_fallthru
      _
    %p124 = scmp.lt.s32.totalorder %s8, 2
    // Predicated region
    $region13: #{chamfer_loss.1} parent=5 // pred_check
      %p125 = pneg %p124
    $region14: #{chamfer_loss.1} parent=5 // pred_check_branch
      %127 = sbr.rel (%p125) target = $region16
    $region15: #{chamfer_loss.1} parent=5 // pred_region
      // Predicated region
      $region17: #{chamfer_loss.1} parent=15 // pred_check
        %p128 = pneg %p49
      $region18: #{chamfer_loss.1} parent=15 // pred_check_branch
        %130 = sbr.rel (%p128) target = $region20
      $region19: #{chamfer_loss.1} parent=15 // pred_region
        %s131 = smul.u32 2, %s16
        %p132 = scmp.lt.s32.totalorder %s15, 1
        %s133 = scalar_select %p132, %s15, 1
        %p134 = scmp.lt.s32.totalorder %s131, 1
        %s135 = scalar_select %p134, %s131, 1
        %s136 = smul.addr %s133, 2
        %s137 = sadd.s32 %s135, %s136
        %s138 = smul.addr %s137, 8
        %s139 = scalar_lea.vmem %s0, %s138
        %s140 = smul.u32 2, %s16
      $region20: #{chamfer_loss.1} parent=15 // pred_fallthru
        _
      // Predicated region
      $region21: #{chamfer_loss.1} parent=15 // pred_check
        %p141 = pneg %p77
      $region22: #{chamfer_loss.1} parent=15 // pred_check_branch
        %143 = sbr.rel (%p141) target = $region24
      $region23: #{chamfer_loss.1} parent=15 // pred_region
        %p144 = scmp.lt.s32.totalorder %s15, 1
        %s145 = scalar_select %p144, %s15, 1
        %p146 = scmp.lt.s32.totalorder %s17, 0
        %s147 = scalar_select %p146, %s17, 0
        %s148 = sadd.s32 %s147, %s145
        %s149 = smul.addr %s148, 8
        %s150 = scalar_lea.vmem %s1, %s149
      $region24: #{chamfer_loss.1} parent=15 // pred_fallthru
        _
    $region16: #{chamfer_loss.1} parent=5 // pred_fallthru
      _
    %p151 = scmp.le.s32.totalorder 1, %s8
    %p152 = scmp.lt.s32.totalorder %s8, 3
    %p153 = pnand %p151, %p152
    %p154 = pneg %p153
    // Predicated region
    $region25: #{chamfer_loss.1} parent=5 // pred_check
      _
    $region26: #{chamfer_loss.1} parent=5 // pred_check_branch
      %156 = sbr.rel (%p153) target = $region28
    $region27: #{chamfer_loss.1} parent=5 // pred_region
      %s157 = ssub.s32 %s8, 1
      %s158 = smul.u32 2, %s19
      %p159 = scmp.lt.s32.totalorder %s18, 1
      %s160 = scalar_select %p159, %s18, 1
      %p161 = scmp.lt.s32.totalorder %s158, 1
      %s162 = scalar_select %p161, %s158, 1
      %s163 = smul.addr %s160, 2
      %s164 = sadd.s32 %s162, %s163
      %s165 = smul.addr %s164, 8
      %s166 = scalar_lea.vmem %s0, %s165
      %p167 = pneg %p55
      %p168 = pneg %p52
      %p169 = scmp.lt.s32.totalorder %s18, 1
      %s170 = scalar_select %p169, %s18, 1
      %p171 = scmp.lt.s32.totalorder %s20, 0
      %s172 = scalar_select %p171, %s20, 0
      %s173 = sadd.s32 %s172, %s170
      %s174 = smul.addr %s173, 8
      %s175 = scalar_lea.vmem %s1, %s174
      %p176 = pneg %p83
      %p177 = pneg %p80
      %p178 = pneg %p109
      %p179 = pneg %p106
      %p180 = scmp.lt.s32.totalorder %s18, 1
      %s181 = scalar_select %p180, %s18, 1
      %s182 = scalar_lea.vmem %s2, %s181
      %s183 = smul.u32 2, %s19
      %p184 = scmp.lt.s32.totalorder %s18, 1
      %s185 = scalar_select %p184, %s18, 1
      %p186 = scmp.lt.s32.totalorder %s183, 1
      %s187 = scalar_select %p186, %s183, 1
      %s188 = smul.addr %s185, 2
      %s189 = sadd.s32 %s187, %s188
      %s190 = smul.addr %s189, 8
      %s191 = scalar_lea.vmem %s0, %s190
      %s192 = smul.u32 2, %s19
      %p193 = scmp.lt.s32.totalorder %s18, 1
      %s194 = scalar_select %p193, %s18, 1
      %p195 = scmp.lt.s32.totalorder %s20, 0
      %s196 = scalar_select %p195, %s20, 0
      %s197 = sadd.s32 %s196, %s194
      %s198 = smul.addr %s197, 8
      %s199 = scalar_lea.vmem %s1, %s198
      %p200 = scmp.lt.s32.totalorder %s18, 1
      %s201 = scalar_select %p200, %s18, 1
      %s202 = scalar_lea.vmem %s2, %s201
      %p203 = scmp.eq.s32.totalorder %s19, 0
      %p204 = scmp.eq.s32.totalorder %s20, 0
      %p205 = pnand %p203, %p204
      %p206 = pneg %p205
      // Predicated region
      $region29: #{chamfer_loss.1} parent=27 // pred_check
        _
      $region30: #{chamfer_loss.1} parent=27 // pred_check_branch
        %208 = sbr.rel (%p205) target = $region32
      $region31: #{chamfer_loss.1} parent=27 // pred_region
        %209 = vst [vmem:[%s202] sm:$0x1] 0.0
      $region32: #{chamfer_loss.1} parent=27 // pred_fallthru
        _
      %v210 = vld [vmem:[%s191] sm:$0xff]
      %v211 = vld [vmem:[%s191 + $0x8] sm:$0xff]
      %v212 = vld [vmem:[%s199] sm:$0xff]
      %vm213 = vcmask 64512
      %v215 = vsel %vm213, %v210, 0
      %v218 = vsel %vm213, %v211, 0
      %220 = vmatpush.msra.mxu0 0.0
      %221 = vmatpush.msra.mxu0 0.0
      %222 = vmatpush.msra.mxu0 0.0
      %223 = vmatpush.msra.mxu0 0.0
      %224 = vmatpush.msra.mxu0 0.0
      %225 = vmatpush.msra.mxu0 0.0
      %226 = vmatpush.msra.mxu0 0.0
      %227 = vmatpush.msra.mxu0 0.0
      %228 = vmatpush.msra.mxu0 0.0
      %229 = vmatpush.msra.mxu0 0.0
      %230 = vmatpush.msra.mxu0 0.0
      %231 = vmatpush.msra.mxu0 0.0
      %232 = vmatpush.msra.mxu0 0.0
      %233 = vmatpush.msra.mxu0 0.0
      %234 = vmatpush.msra.mxu0 0.0
      %235 = vmatpush.msra.mxu0 %v212
      %236 = vmatmul.f32.gmra.mxu0 %v215
      %v237 = vpop.f32.mrf.mxu0
      %v238 = vadd.f32 0.0, %v237
      %239 = vmatmul.f32.gmra.mxu0 %v218
      %v240 = vpop.f32.mrf.mxu0
      %v241 = vadd.f32 0.0, %v240
      %242 = vdwg.mxu0
      %v243 = vmul.f32 %v210, %v210
      %v244 = vmul.f32 %v211, %v211
      %v245 = vsel %vm213, %v243, 0.0
      %246 = vadd.xlane.f32.xlu0 %v245
      %v247 = vpop.xlane.xlu0 %246
      %v248 = vsel %vm213, %v244, 0.0
      %249 = vadd.xlane.f32.xlu0 %v248
      %v250 = vpop.xlane.xlu0 %249
      %v251 = vmul.f32 %v212, %v212
      %v252 = vrot.slane %v251, 4
      %v253 = vadd.f32 %v251, %v252
      %v254 = vrot.slane %v253, 2
      %v255 = vadd.f32 %v253, %v254
      %v256 = vrot.slane %v255, 1
      %v257 = vadd.f32 %v255, %v256
      %v258 = vadd.f32 %v247, %v257
      %v259 = vadd.f32 %v250, %v257
      %v260 = vmul.f32 %v238, 2.0
      %v261 = vmul.f32 %v241, 2.0
      %v262 = vsub.f32 %v258, %v260
      %v263 = vsub.f32 %v259, %v261
      %v264 = vmin.f32 %v262, %v263
      // Predicated region
      $region33: #{chamfer_loss.1} parent=27 // pred_check
        %p265 = pneg %p204
      $region34: #{chamfer_loss.1} parent=27 // pred_check_branch
        %267 = sbr.rel (%p265) target = $region36
      $region35: #{chamfer_loss.1} parent=27 // pred_region
        %268 = vst [vmem:[#allocation2] sm:$0xff] %v262
        %269 = vst [vmem:[#allocation2 + $0x8] sm:$0xff] %v263
      $region36: #{chamfer_loss.1} parent=27 // pred_fallthru
        _
      %p270 = scmp.gt.s32.totalorder %s20, 0
      // Predicated region
      $region37: #{chamfer_loss.1} parent=27 // pred_check
        %p271 = pneg %p270
      $region38: #{chamfer_loss.1} parent=27 // pred_check_branch
        %273 = sbr.rel (%p271) target = $region40
      $region39: #{chamfer_loss.1} parent=27 // pred_region
        %v274 = vld [vmem:[#allocation2] sm:$0xff]
        %v275 = vld [vmem:[#allocation2 + $0x8] sm:$0xff]
        %v276 = vmin.f32 %v274, %v262
        %v277 = vmin.f32 %v275, %v263
        %278 = vst [vmem:[#allocation2] sm:$0xff] %v276
        %279 = vst [vmem:[#allocation2 + $0x8] sm:$0xff] %v277
      $region40: #{chamfer_loss.1} parent=27 // pred_fallthru
        _
      // Predicated region
      $region41: #{chamfer_loss.1} parent=27 // pred_check
        %p280 = pneg %p203
      $region42: #{chamfer_loss.1} parent=27 // pred_check_branch
        %282 = sbr.rel (%p280) target = $region44
      $region43: #{chamfer_loss.1} parent=27 // pred_region
        %s283 = smul.u32 %s20, 8
        %s284 = scalar_lea.vmem [#allocation3], %s283
        %285 = vst [vmem:[%s284] sm:$0xff] %v264
      $region44: #{chamfer_loss.1} parent=27 // pred_fallthru
        _
      %p286 = scmp.gt.s32.totalorder %s19, 0
      // Predicated region
      $region45: #{chamfer_loss.1} parent=27 // pred_check
        %p287 = pneg %p286
      $region46: #{chamfer_loss.1} parent=27 // pred_check_branch
        %289 = sbr.rel (%p287) target = $region48
      $region47: #{chamfer_loss.1} parent=27 // pred_region
        %s290 = smul.u32 %s20, 8
        %s291 = scalar_lea.vmem [#allocation3], %s290
        %v292 = vld [vmem:[%s291] sm:$0xff]
        %v293 = vmin.f32 %v292, %v264
        %294 = vst [vmem:[%s291] sm:$0xff] %v293
      $region48: #{chamfer_loss.1} parent=27 // pred_fallthru
        _
      // Predicated region
      $region49: #{chamfer_loss.1} parent=27 // pred_check
        %p295 = pneg %p204
      $region50: #{chamfer_loss.1} parent=27 // pred_check_branch
        %297 = sbr.rel (%p295) target = $region52
      $region51: #{chamfer_loss.1} parent=27 // pred_region
        %v298 = vld [vmem:[#allocation2] sm:$0xff]
        %v299 = vld [vmem:[#allocation2 + $0x8] sm:$0xff]
        %300 = vmin.xlane.f32.xlu0 %v298
        %v301 = vpop.xlane.xlu0 %300
        %302 = vmin.xlane.f32.xlu0 %v299
        %v303 = vpop.xlane.xlu0 %302
        %v304 = vlaneseq
        %v305 = vand.u32 %v304, 127
        %vm306 = vcmp.eq.s32.totalorder %v305, 0
        %v307 = vld [vmem:[%s202] sm:$0x1]
        %vm308 = vcmask 7168
        %v309 = vsel %vm308, %v301, 0.0
        %v310 = vsel %vm308, %v303, 0.0
        %v311 = vadd.f32 %v309, %v310
        %312 = vadd.xlane.f32.xlu0 %v311
        %v313 = vpop.xlane.xlu0 %312
        %v314 = vrot.slane %v313, 4
        %v315 = vadd.f32 %v313, %v314
        %v316 = vrot.slane %v315, 2
        %v317 = vadd.f32 %v315, %v316
        %v318 = vrot.slane %v317, 1
        %v319 = vadd.f32 %v317, %v318
        %s320 = vtos %v319
        %v321 = vstv %s320
        %v322 = vsel %vm306, %v321, 0.0
        %v323 = vadd.f32 %v307, %v322
        %324 = vst [vmem:[%s202] sm:$0x1] %v323
      $region52: #{chamfer_loss.1} parent=27 // pred_fallthru
        _
      // Predicated region
      $region53: #{chamfer_loss.1} parent=27 // pred_check
        %p325 = pneg %p203
      $region54: #{chamfer_loss.1} parent=27 // pred_check_branch
        %327 = sbr.rel (%p325) target = $region56
      $region55: #{chamfer_loss.1} parent=27 // pred_region
        %s328 = smul.u32 %s20, 8
        %s329 = scalar_lea.vmem [#allocation3], %s328
        %v330 = vld [vmem:[%s329] sm:$0xff]
        %v331 = vrot.slane %v330, 4
        %v332 = vmin.f32 %v330, %v331
        %v333 = vrot.slane %v332, 2
        %v334 = vmin.f32 %v332, %v333
        %v335 = vrot.slane %v334, 1
        %v336 = vmin.f32 %v334, %v335
        %s337 = smul.u32 %s20, 128
        %v338 = vlaneseq
        %v339 = vand.u32 %v338, 127
        %v340 = vstv %s337
        %v341 = vadd.s32 %v340, %v339
        %vm342 = vcmp.lt.s32.totalorder %v341, 16
        %v343 = vsel %vm342, %v336, 0.0
        %v344 = vld [vmem:[%s202] sm:$0x1]
        %v345 = vadd.f32 %v344, %v343
        %346 = vst [vmem:[%s202] sm:$0x1] %v345
      $region56: #{chamfer_loss.1} parent=27 // pred_fallthru
        _
      %p347 = scmp.lt.s32.totalorder %s18, 1
      %s348 = scalar_select %p347, %s18, 1
      %s349 = scalar_lea.vmem %s2, %s348
      // Predicated region
      $region57: #{chamfer_loss.1} parent=27 // pred_check
        %p350 = pneg %p106
      $region58: #{chamfer_loss.1} parent=27 // pred_check_branch
        %352 = sbr.rel (%p350) target = $region60
      $region59: #{chamfer_loss.1} parent=27 // pred_region
        _
      $region60: #{chamfer_loss.1} parent=27 // pred_fallthru
        _
    $region28: #{chamfer_loss.1} parent=5 // pred_fallthru
      _
    %p353 = scmp.le.s32.totalorder 2, %s8
    // Predicated region
    $region61: #{chamfer_loss.1} parent=5 // pred_check
      %p354 = pneg %p353
    $region62: #{chamfer_loss.1} parent=5 // pred_check_branch
      %356 = sbr.rel (%p354) target = $region64
    $region63: #{chamfer_loss.1} parent=5 // pred_region
      %s357 = ssub.s32 %s8, 2
      // Predicated region
      $region65: #{chamfer_loss.1} parent=63 // pred_check
        %p358 = pneg %p112
      $region66: #{chamfer_loss.1} parent=63 // pred_check_branch
        %360 = sbr.rel (%p358) target = $region68
      $region67: #{chamfer_loss.1} parent=63 // pred_region
        %p361 = scmp.lt.s32.totalorder %s21, 1
        %s362 = scalar_select %p361, %s21, 1
        %s363 = scalar_lea.vmem %s2, %s362
      $region68: #{chamfer_loss.1} parent=63 // pred_fallthru
        _
    $region64: #{chamfer_loss.1} parent=5 // pred_fallthru
      _
  $region6: #{chamfer_loss.1} parent=0 // loop_footer
    %s12 = sadd.s32 1, %s8
  $region7: #{chamfer_loss.1} parent=0 // loop_footer_branch
    %7 = sbr.rel target = $region3
  $region8: #{chamfer_loss.1} parent=0 // loop_exit
    _

</llo_original>
